<compile_context>
chip_gen: v7x
topology: tpu7x:2x2x1
jax: 0.10.0
libtpu: 0.0.40
codegen_flags: <defaults>
</compile_context>

<pallas_src>
import jax
import jax.numpy as jnp
from jax.experimental import pallas as pl
from jax.experimental.pallas import tpu as pltpu

LANE = 128     # lane width: hidden (VMEM-only) dims padded to this
SUBLANE = 8    # sublane width: batch tile and contraction dims aligned to this


def _round_up(x, m):
    return (x + m - 1) // m * m


# ----------------------------------------------------------------------------
# Generation-aware VMEM budget (also used as vmem_limit_bytes).
# ----------------------------------------------------------------------------
def _vmem_budget_bytes():
    cap = 64 << 20  # conservative fallback (v7x per-core VMEM)
    try:
        info = pltpu.get_tpu_info()
        cap = int(getattr(info, "vmem_capacity_bytes", cap))
    except Exception:
        pass
    # Leave headroom for compiler-internal scratch / semaphores.
    return int(min(cap * 3 // 4, 96 << 20))


# ----------------------------------------------------------------------------
# Kernel: one (tile_b, in_k) batch tile -> (tile_b, out_d) output tile.
# Weights/biases are grid-invariant (constant index_maps) -> VMEM-resident.
# ----------------------------------------------------------------------------
def _mlp3_kernel(x_ref, w1_ref, b1_ref, w2_ref, b2_ref, w3_ref, b3_ref, o_ref):
    cdt = w1_ref.dtype
    # Layer 1: cast x to the compute dtype only when feeding the MXU.
    h = jnp.dot(x_ref[...].astype(cdt), w1_ref[...],
                preferred_element_type=jnp.float32)
    h = h.astype(cdt) + b1_ref[...]          # bias add in compute dtype
    # Layer 2.
    h = jnp.dot(h, w2_ref[...], preferred_element_type=jnp.float32)
    h = h.astype(cdt) + b2_ref[...]
    # Layer 3: f32 accumulation + f32 final bias.
    out = jnp.dot(h, w3_ref[...], preferred_element_type=jnp.float32)
    out = out + b3_ref[...]
    o_ref[...] = out.astype(o_ref.dtype)


# ----------------------------------------------------------------------------
# One-time parameter preparation (NOT in the per-forward hot path).
# ----------------------------------------------------------------------------
def prepare_params(params, compute_dtype=jnp.float32):
    """Transpose PyTorch (out, in) weights to (in, out).

    Padding policy (zero-padded, so padded rows/cols contribute nothing):
      * in_dim   -> round_up(in_dim, 8)   (contraction side; kept narrow)
      * hidden   -> round_up(hidden, 128) (VMEM-only, lane-dense for the MXU)
      * out_dim  -> unpadded              (full-array-dim output block)
    Weights + inner biases are cast to `compute_dtype`; the final bias stays
    f32 (added on the f32 accumulator)."""
    w1, b1 = params["layer1"]
    w2, b2 = params["layer2"]
    w3, b3 = params["layer3"]
    in_d, h1, h2, out_d = (int(w1.shape[1]), int(w1.shape[0]),
                           int(w2.shape[0]), int(w3.shape[0]))
    in_k = _round_up(in_d, SUBLANE)
    h1_p = _round_up(h1, LANE)
    h2_p = _round_up(h2, LANE)

    def pad_w(w, rows, cols, r_p, c_p):
        wt = jnp.zeros((r_p, c_p), compute_dtype)
        return wt.at[:rows, :cols].set(w.T.astype(compute_dtype))

    w1t = pad_w(w1, in_d, h1, in_k, h1_p)
    w2t = pad_w(w2, h1, h2, h1_p, h2_p)
    w3t = pad_w(w3, h2, out_d, h2_p, out_d)
    b1r = jnp.zeros((1, h1_p), compute_dtype).at[0, :h1].set(
        b1.astype(compute_dtype))
    b2r = jnp.zeros((1, h2_p), compute_dtype).at[0, :h2].set(
        b2.astype(compute_dtype))
    b3r = b3.astype(jnp.float32).reshape(1, out_d)

    padded = {"layer1": (w1t, b1r), "layer2": (w2t, b2r), "layer3": (w3t, b3r)}
    dims = {"in_dim": in_d, "h1": h1, "h2": h2, "out_dim": out_d}
    return padded, dims


# ----------------------------------------------------------------------------
# Batch tiling: equal-sized tiles, VMEM-budget aware, megacore friendly.
# ----------------------------------------------------------------------------
def _choose_batch_tiling(B, in_k, h1_p, h2_p, out_d, x_itemsize,
                         weight_bytes, vmem_budget):
    b_min = _round_up(B, SUBLANE)
    # Per-row VMEM: double-buffered x tile + double-buffered f32 out tile +
    # the two live intermediates (counted at f32, conservative).
    per_row = (2 * in_k * x_itemsize + 2 * out_d * 4 + (h1_p + h2_p) * 4)
    # Resident weights counted twice (double-buffer worst case) + headroom.
    budget = max(vmem_budget - 2 * weight_bytes - (2 << 20), 1 << 20)
    tile = int(budget // per_row) // SUBLANE * SUBLANE
    tile = max(SUBLANE, min(tile, 2048, b_min))
    n = pl.cdiv(b_min, tile)
    # v7x megacore: with ("parallel",) semantics, >=2 grid steps lets both
    # TensorCores work.  Only force it when each half is still substantial.
    if b_min >= 512:
        n = max(n, 2)
    tile = _round_up(pl.cdiv(b_min, n), SUBLANE)
    return tile, n * tile   # (tile_b, b_pad) -- padding < n*8 rows


# ----------------------------------------------------------------------------
# Forward pass.
# ----------------------------------------------------------------------------
def simple_net_forward(x, padded_params, dims, *, tile_b=None):
    """x: (B, in_dim).  padded_params/dims: from prepare_params()."""
    w1t, b1r = padded_params["layer1"]
    w2t, b2r = padded_params["layer2"]
    w3t, b3r = padded_params["layer3"]

    in_d, h1, h2, out_d = dims["in_dim"], dims["h1"], dims["h2"], dims["out_dim"]
    in_k, h1_p = w1t.shape
    h2_p, _ = w3t.shape
    B = x.shape[0]

    weight_bytes = sum(
        w.size * w.dtype.itemsize + b.size * b.dtype.itemsize
        for w, b in (padded_params[k] for k in ("layer1", "layer2", "layer3"))
    )
    vmem_budget = _vmem_budget_bytes()

    if tile_b is None:
        tile_b, b_pad = _choose_batch_tiling(
            B, in_k, h1_p, h2_p, out_d, x.dtype.itemsize,
            weight_bytes, vmem_budget)
    else:
        tile_b = _round_up(tile_b, SUBLANE)
        b_pad = _round_up(B, tile_b)
    grid_b = b_pad // tile_b

    # Pad x only when actually needed (no-op for 8-aligned B and in_dim).
    if b_pad != B or in_k != in_d:
        x_p = jnp.zeros((b_pad, in_k), x.dtype).at[:B, :in_d].set(x)
    else:
        x_p = x

    flops = 2 * B * (in_d * h1 + h1 * h2 + h2 * out_d)
    bytes_accessed = (x_p.size * x_p.dtype.itemsize
                      + weight_bytes
                      + b_pad * out_d * 4)
    cost = pl.CostEstimate(flops=flops, transcendentals=0,
                           bytes_accessed=int(bytes_accessed))

    out_padded = pl.pallas_call(
        _mlp3_kernel,
        out_shape=jax.ShapeDtypeStruct((b_pad, out_d), jnp.float32),
        grid=(grid_b,),
        in_specs=[
            # Batch-tiled activation: auto-pipelined HBM<->VMEM per grid step.
            # Last dim equals the full array dim -> no 128 padding needed.
            pl.BlockSpec((tile_b, in_k), lambda i: (i, 0)),
            # Weights / biases: constant index_map -> VMEM-resident.
            pl.BlockSpec((in_k, h1_p), lambda i: (0, 0)),
            pl.BlockSpec((1, h1_p), lambda i: (0, 0)),
            pl.BlockSpec((h1_p, h2_p), lambda i: (0, 0)),
            pl.BlockSpec((1, h2_p), lambda i: (0, 0)),
            pl.BlockSpec((h2_p, out_d), lambda i: (0, 0)),
            pl.BlockSpec((1, out_d), lambda i: (0, 0)),
        ],
        # Output block last dim equals the full array dim (unpadded out_d).
        out_specs=pl.BlockSpec((tile_b, out_d), lambda i: (i, 0)),
        compiler_params=pltpu.CompilerParams(
            dimension_semantics=("parallel",),      # megacore sharding on v7x
            vmem_limit_bytes=int(vmem_budget)),     # matches the tile budget
        cost_estimate=cost,
    )(x_p, w1t, b1r, w2t, b2r, w3t, b3r)

    out = out_padded if b_pad == B else out_padded[:B]
    return out.astype(x.dtype)


# ----------------------------------------------------------------------------
# Deterministic init mimicking nn.Linear's uniform(-1/sqrt(fan_in), ...).
# ----------------------------------------------------------------------------
def init_params(key, in_dim, n_hidden_1, n_hidden_2, out_dim):
    def linear(k, fan_in, fan_out):
        kw, kb = jax.random.split(k)
        bound = 1.0 / jnp.sqrt(fan_in)
        w = jax.random.uniform(kw, (fan_out, fan_in), jnp.float32, -bound, bound)
        b = jax.random.uniform(kb, (fan_out,), jnp.float32, -bound, bound)
        return w, b

    k1, k2, k3 = jax.random.split(key, 3)
    return {
        "layer1": linear(k1, in_dim, n_hidden_1),
        "layer2": linear(k2, n_hidden_1, n_hidden_2),
        "layer3": linear(k3, n_hidden_2, out_dim),
    }


if __name__ == "__main__":
    # Small shapes consistent with the module: x is (batch, in_dim).
    batch, in_dim, n_hidden_1, n_hidden_2, out_dim = 8, 32, 64, 48, 16

    key = jax.random.PRNGKey(0)
    kx, kp = jax.random.split(key)
    x = jax.random.normal(kx, (batch, in_dim), jnp.float32)
    params = init_params(kp, in_dim, n_hidden_1, n_hidden_2, out_dim)

    # Pure-JAX reference.
    w1, b1 = params["layer1"]; w2, b2 = params["layer2"]; w3, b3 = params["layer3"]
    ref = ((x @ w1.T + b1) @ w2.T + b2) @ w3.T + b3

    # f32 path (exact-compute check; recommended on v5e).
    padded_f32, dims = prepare_params(params, compute_dtype=jnp.float32)
    out = simple_net_forward(x, padded_f32, dims)
    jax.block_until_ready(out)
    assert out.shape == (batch, out_dim)
    assert jnp.allclose(out, ref, atol=1e-4, rtol=1e-4)

    # bf16 compute path (MXU fast path on v6e/v7x) — looser tolerance since
    # x and the inter-layer activations are bf16 across three layers.
    padded_bf16, dims_bf16 = prepare_params(params, compute_dtype=jnp.bfloat16)
    out_bf16 = simple_net_forward(x, padded_bf16, dims_bf16)
    jax.block_until_ready(out_bf16)
    assert out_bf16.shape == (batch, out_dim)
    assert jnp.allclose(out_bf16, ref, atol=5e-2, rtol=5e-2)

    print("KERNEL_OK")
</pallas_src>

<mosaic_0001>
module attributes {stable_mosaic.version = 11 : i64} {
  func.func @_mlp3_kernel(%arg0: i32, %arg1: memref<8x32xf32, #tpu.memory_space<vmem>>, %arg2: memref<32x128xf32, #tpu.memory_space<vmem>>, %arg3: memref<1x128xf32, #tpu.memory_space<vmem>>, %arg4: memref<128x128xf32, #tpu.memory_space<vmem>>, %arg5: memref<1x128xf32, #tpu.memory_space<vmem>>, %arg6: memref<128x16xf32, #tpu.memory_space<vmem>>, %arg7: memref<1x16xf32, #tpu.memory_space<vmem>>, %arg8: memref<8x16xf32, #tpu.memory_space<vmem>>) attributes {dimension_semantics = [#tpu.dimension_semantics<parallel>], iteration_bounds = array<i64: 1>, scalar_prefetch = 0 : i64, scratch_operands = 0 : i64, tpu.core_type = #tpu.core_type<tc>, window_params = [{transform_indices = @transform_0, window_bounds = array<i64: 8, 32>}, {pipeline_mode = #tpu.pipeline_mode<synchronous>, transform_indices = @transform_1, window_bounds = array<i64: 32, 128>}, {pipeline_mode = #tpu.pipeline_mode<synchronous>, transform_indices = @transform_2, window_bounds = array<i64: 1, 128>}, {pipeline_mode = #tpu.pipeline_mode<synchronous>, transform_indices = @transform_3, window_bounds = array<i64: 128, 128>}, {pipeline_mode = #tpu.pipeline_mode<synchronous>, transform_indices = @transform_4, window_bounds = array<i64: 1, 128>}, {pipeline_mode = #tpu.pipeline_mode<synchronous>, transform_indices = @transform_5, window_bounds = array<i64: 128, 16>}, {pipeline_mode = #tpu.pipeline_mode<synchronous>, transform_indices = @transform_6, window_bounds = array<i64: 1, 16>}, {transform_indices = @transform_7, window_bounds = array<i64: 8, 16>}]} {
    %c0 = arith.constant 0 : index
    %c0_0 = arith.constant 0 : index
    %0 = vector.load %arg1[%c0, %c0_0] : memref<8x32xf32, #tpu.memory_space<vmem>>, vector<8x32xf32>
    %c0_1 = arith.constant 0 : index
    %c0_2 = arith.constant 0 : index
    %1 = vector.load %arg2[%c0_1, %c0_2] : memref<32x128xf32, #tpu.memory_space<vmem>>, vector<32x128xf32>
    %cst = arith.constant dense<0.000000e+00> : vector<8x128xf32>
    %2 = tpu.matmul %0, %1, %cst {dimension_numbers = #tpu.dot_dimension_numbers<[1], [0], [0], [1], [0, 0, 1, 1], [], []>} : vector<8x32xf32>, vector<32x128xf32>, vector<8x128xf32> -> vector<8x128xf32>
    %c0_3 = arith.constant 0 : index
    %c0_4 = arith.constant 0 : index
    %3 = vector.load %arg3[%c0_3, %c0_4] : memref<1x128xf32, #tpu.memory_space<vmem>>, vector<1x128xf32>
    %4 = vector.broadcast %3 : vector<1x128xf32> to vector<8x128xf32>
    %5 = arith.addf %2, %4 : vector<8x128xf32>
    %c0_5 = arith.constant 0 : index
    %c0_6 = arith.constant 0 : index
    %6 = vector.load %arg4[%c0_5, %c0_6] : memref<128x128xf32, #tpu.memory_space<vmem>>, vector<128x128xf32>
    %cst_7 = arith.constant dense<0.000000e+00> : vector<8x128xf32>
    %7 = tpu.matmul %5, %6, %cst_7 {dimension_numbers = #tpu.dot_dimension_numbers<[1], [0], [0], [1], [0, 0, 1, 1], [], []>} : vector<8x128xf32>, vector<128x128xf32>, vector<8x128xf32> -> vector<8x128xf32>
    %c0_8 = arith.constant 0 : index
    %c0_9 = arith.constant 0 : index
    %8 = vector.load %arg5[%c0_8, %c0_9] : memref<1x128xf32, #tpu.memory_space<vmem>>, vector<1x128xf32>
    %9 = vector.broadcast %8 : vector<1x128xf32> to vector<8x128xf32>
    %10 = arith.addf %7, %9 : vector<8x128xf32>
    %c0_10 = arith.constant 0 : index
    %c0_11 = arith.constant 0 : index
    %11 = vector.load %arg6[%c0_10, %c0_11] : memref<128x16xf32, #tpu.memory_space<vmem>>, vector<128x16xf32>
    %cst_12 = arith.constant dense<0.000000e+00> : vector<8x16xf32>
    %12 = tpu.matmul %10, %11, %cst_12 {dimension_numbers = #tpu.dot_dimension_numbers<[1], [0], [0], [1], [0, 0, 1, 1], [], []>} : vector<8x128xf32>, vector<128x16xf32>, vector<8x16xf32> -> vector<8x16xf32>
    %c0_13 = arith.constant 0 : index
    %c0_14 = arith.constant 0 : index
    %13 = vector.load %arg7[%c0_13, %c0_14] : memref<1x16xf32, #tpu.memory_space<vmem>>, vector<1x16xf32>
    %14 = vector.broadcast %13 : vector<1x16xf32> to vector<8x16xf32>
    %15 = arith.addf %12, %14 : vector<8x16xf32>
    %c0_15 = arith.constant 0 : index
    %c0_16 = arith.constant 0 : index
    %16 = vector.load %arg8[%c0_15, %c0_16] : memref<8x16xf32, #tpu.memory_space<vmem>>, vector<8x16xf32>
    tpu.vector_store %arg8[%c0_15, %c0_16], %15 {strides = array<i32>} : memref<8x16xf32, #tpu.memory_space<vmem>>, vector<8x16xf32>,
    return
  }
  func.func @transform_0(%arg0: i32) -> (i32, i32) {
    %c0_i32 = arith.constant 0 : i32
    %c0_i32_0 = arith.constant 0 : i32
    return %arg0, %c0_i32 : i32, i32
  }
  func.func @transform_1(%arg0: i32) -> (i32, i32) {
    %c0_i32 = arith.constant 0 : i32
    %c0_i32_0 = arith.constant 0 : i32
    %c0_i32_1 = arith.constant 0 : i32
    return %c0_i32, %c0_i32_0 : i32, i32
  }
  func.func @transform_2(%arg0: i32) -> (i32, i32) {
    %c0_i32 = arith.constant 0 : i32
    %c0_i32_0 = arith.constant 0 : i32
    %c0_i32_1 = arith.constant 0 : i32
    return %c0_i32, %c0_i32_0 : i32, i32
  }
  func.func @transform_3(%arg0: i32) -> (i32, i32) {
    %c0_i32 = arith.constant 0 : i32
    %c0_i32_0 = arith.constant 0 : i32
    %c0_i32_1 = arith.constant 0 : i32
    return %c0_i32, %c0_i32_0 : i32, i32
  }
  func.func @transform_4(%arg0: i32) -> (i32, i32) {
    %c0_i32 = arith.constant 0 : i32
    %c0_i32_0 = arith.constant 0 : i32
    %c0_i32_1 = arith.constant 0 : i32
    return %c0_i32, %c0_i32_0 : i32, i32
  }
  func.func @transform_5(%arg0: i32) -> (i32, i32) {
    %c0_i32 = arith.constant 0 : i32
    %c0_i32_0 = arith.constant 0 : i32
    %c0_i32_1 = arith.constant 0 : i32
    return %c0_i32, %c0_i32_0 : i32, i32
  }
  func.func @transform_6(%arg0: i32) -> (i32, i32) {
    %c0_i32 = arith.constant 0 : i32
    %c0_i32_0 = arith.constant 0 : i32
    %c0_i32_1 = arith.constant 0 : i32
    return %c0_i32, %c0_i32_0 : i32, i32
  }
  func.func @transform_7(%arg0: i32) -> (i32, i32) {
    %c0_i32 = arith.constant 0 : i32
    %c0_i32_0 = arith.constant 0 : i32
    return %arg0, %c0_i32 : i32, i32
  }
}

</mosaic_0001>

<llo_original>
// kernel: tpu_custom_call.1
$region0: #{tpu_custom_call.1}
  #allocation0 [shape = 'u32[]', space=smem, size = 0x4, offset = 0x4, fixed_abs, tag = 'smem constant byte address 0x4 - core index']
  #allocation1 [shape = 'u32[144,128]{1,0:T(1,128)}', space=vmem, size = 0x12000, scoped, tag = 'internal scratch']
  %s0 = inlined_call_operand.vmem [shape: f32[8,32], index: 0, kind: input, shape index: {}]
  %s1 = inlined_call_operand.hbm [shape: f32[32,128], index: 1, kind: input, shape index: {}]
  %s2 = inlined_call_operand.vmem [shape: f32[1,128], index: 2, kind: input, shape index: {}]
  %s3 = inlined_call_operand.vmem [shape: f32[128,128], index: 3, kind: input, shape index: {}]
  %s4 = inlined_call_operand.vmem [shape: f32[1,128], index: 4, kind: input, shape index: {}]
  %s5 = inlined_call_operand.vmem [shape: f32[128,16], index: 5, kind: input, shape index: {}]
  %s6 = inlined_call_operand.vmem [shape: f32[1,16], index: 6, kind: input, shape index: {}]
  %s7 = inlined_call_operand.hbm [shape: f32[8,16], index: 7, kind: output, shape index: {}]
  %s8 = sld [smem:[#allocation0]]
  $region42: #{tpu_custom_call.1} parent=0
    _
  %s10 = ssub.s32 1, %s8
  %s11 = scalar_select 0, %s10, %s8
  $region1: #{tpu_custom_call.1} parent=0
    #allocation2 [shape = 'u8[16384]{0}', space=vmem, size = 0x4000, scoped, tag = 'input window, operand 1, single buffered']
    #allocation3 [shape = 's32[1]{0}', space=sflag, size = 0x4, scoped, tag = 'scoped memory for tpu_custom_call.1']
    #allocation4 [shape = 's32[1]{0}', space=sflag, size = 0x4, scoped, tag = 'scoped memory for tpu_custom_call.1']
    #allocation5 [shape = 'u8[4096]{0}', space=vmem, size = 0x1000, scoped, tag = 'output window, operand 0, single buffered']
    %12 = vsyncpa [#allocation3], 0
    %13 = vsyncpa [#allocation4], 0
    // Predicated region
    $region2: #{tpu_custom_call.1} parent=1 // pred_check
      _
    $region3: #{tpu_custom_call.1} parent=1 // pred_check_branch
      %15 = sbr.rel (0) target = $region5
    $region4: #{tpu_custom_call.1} parent=1 // pred_region
      _
    $region5: #{tpu_custom_call.1} parent=1 // pred_fallthru
      _
    // Predicated region
    $region6: #{tpu_custom_call.1} parent=1 // pred_check
      _
    $region7: #{tpu_custom_call.1} parent=1 // pred_check_branch
      %17 = sbr.rel (0) target = $region9
    $region8: #{tpu_custom_call.1} parent=1 // pred_region
      %s19 = ssub.s32 512, 512
      %20 = vsyncadd [#allocation3], %s19
      %s21 = sshll.u32 [#allocation2], 4
      %s22 = int_to_ptr.vmem [resolvable:$true] %s21
      %27 = dma.hbm_to_vmem [thread:$0]  %s1, 512, %s22, [#allocation3], 128, 128, 8
    $region9: #{tpu_custom_call.1} parent=1 // pred_fallthru
      _
    // Predicated region
    $region10: #{tpu_custom_call.1} parent=1 // pred_check
      _
    $region11: #{tpu_custom_call.1} parent=1 // pred_check_branch
      %29 = sbr.rel (0) target = $region13
    $region12: #{tpu_custom_call.1} parent=1 // pred_region
      _
    $region13: #{tpu_custom_call.1} parent=1 // pred_fallthru
      _
    // Predicated region
    $region14: #{tpu_custom_call.1} parent=1 // pred_check
      _
    $region15: #{tpu_custom_call.1} parent=1 // pred_check_branch
      %31 = sbr.rel (0) target = $region17
    $region16: #{tpu_custom_call.1} parent=1 // pred_region
      _
    $region17: #{tpu_custom_call.1} parent=1 // pred_fallthru
      _
    // Predicated region
    $region18: #{tpu_custom_call.1} parent=1 // pred_check
      _
    $region19: #{tpu_custom_call.1} parent=1 // pred_check_branch
      %33 = sbr.rel (0) target = $region21
    $region20: #{tpu_custom_call.1} parent=1 // pred_region
      _
    $region21: #{tpu_custom_call.1} parent=1 // pred_fallthru
      _
    // Predicated region
    $region22: #{tpu_custom_call.1} parent=1 // pred_check
      _
    $region23: #{tpu_custom_call.1} parent=1 // pred_check_branch
      %35 = sbr.rel (0) target = $region25
    $region24: #{tpu_custom_call.1} parent=1 // pred_region
      _
    $region25: #{tpu_custom_call.1} parent=1 // pred_fallthru
      _
    // Predicated region
    $region26: #{tpu_custom_call.1} parent=1 // pred_check
      _
    $region27: #{tpu_custom_call.1} parent=1 // pred_check_branch
      %37 = sbr.rel (0) target = $region29
    $region28: #{tpu_custom_call.1} parent=1 // pred_region
      _
    $region29: #{tpu_custom_call.1} parent=1 // pred_fallthru
      _
    // Predicated region
    $region30: #{tpu_custom_call.1} parent=1 // pred_check
      _
    $region31: #{tpu_custom_call.1} parent=1 // pred_check_branch
      %39 = sbr.rel (0) target = $region33
    $region32: #{tpu_custom_call.1} parent=1 // pred_region
      %40 = dma.done [#allocation3], 512
    $region33: #{tpu_custom_call.1} parent=1 // pred_fallthru
      _
    %v41 = vld [vmem:[%s0] sm:$0xff]
    %v42 = vld [vmem:[#allocation2] sm:$0xff]
    %v43 = vld [vmem:[#allocation2 + $0x8] sm:$0xff]
    %v44 = vld [vmem:[#allocation2 + $0x10] sm:$0xff]
    %v45 = vld [vmem:[#allocation2 + $0x18] sm:$0xff]
    %v46 = vld [vmem:[%s2] sm:$0x1]
    %v48 = vlaneseq
    %v49 = vshrl.u32 %v48, 7
    %v50 = vsub.s32 0, %v49
    %v51 = vrot.slane %v46, %v50
    %vm53 = vcmask 261120
    %v55 = vsel %vm53, %v41, 0
    %57 = vmatprep.subr.mxu0 0.0
    %58 = vmatpush1.msra.mxu0 %v42
    %59 = vmatprep.subr.mxu0 0.0
    %60 = vmatpush1.msra.mxu0 %v43
    %61 = vmatprep.subr.mxu0 0.0
    %62 = vmatpush1.msra.mxu0 %v44
    %63 = vmatprep.subr.mxu0 0.0
    %64 = vmatpush1.msra.mxu0 %v45
    %65 = vmatprep.subr.mxu0 0.0
    %66 = vmatpush1.msra.mxu0 0.0
    %67 = vmatprep.subr.mxu0 0.0
    %68 = vmatpush1.msra.mxu0 0.0
    %69 = vmatprep.subr.mxu0 0.0
    %70 = vmatpush1.msra.mxu0 0.0
    %71 = vmatprep.subr.mxu0 0.0
    %72 = vmatpush1.msra.mxu0 0.0
    %73 = vmatprep.subr.mxu0 0.0
    %74 = vmatpush1.msra.mxu0 0.0
    %75 = vmatprep.subr.mxu0 0.0
    %76 = vmatpush1.msra.mxu0 0.0
    %77 = vmatprep.subr.mxu0 0.0
    %78 = vmatpush1.msra.mxu0 0.0
    %79 = vmatprep.subr.mxu0 0.0
    %80 = vmatpush1.msra.mxu0 0.0
    %81 = vmatprep.subr.mxu0 0.0
    %82 = vmatpush1.msra.mxu0 0.0
    %83 = vmatprep.subr.mxu0 0.0
    %84 = vmatpush1.msra.mxu0 0.0
    %85 = vmatprep.subr.mxu0 0.0
    %86 = vmatpush1.msra.mxu0 0.0
    %87 = vmatprep.subr.mxu0 0.0
    %88 = vmatpush1.msra.mxu0 0.0
    %89 = vmatprep.subr.mxu0 0.0
    %90 = vmatpush1.msra.mxu0 0.0
    %91 = vmatprep.subr.mxu0 0.0
    %92 = vmatpush1.msra.mxu0 0.0
    %93 = vmatprep.subr.mxu0 0.0
    %94 = vmatpush1.msra.mxu0 0.0
    %95 = vmatprep.subr.mxu0 0.0
    %96 = vmatpush1.msra.mxu0 0.0
    %97 = vmatprep.subr.mxu0 0.0
    %98 = vmatpush1.msra.mxu0 0.0
    %99 = vmatprep.subr.mxu0 0.0
    %100 = vmatpush1.msra.mxu0 0.0
    %101 = vmatprep.subr.mxu0 0.0
    %102 = vmatpush1.msra.mxu0 0.0
    %103 = vmatprep.subr.mxu0 0.0
    %104 = vmatpush1.msra.mxu0 0.0
    %105 = vmatprep.subr.mxu0 0.0
    %106 = vmatpush1.msra.mxu0 0.0
    %107 = vmatprep.subr.mxu0 0.0
    %108 = vmatpush1.msra.mxu0 0.0
    %109 = vmatprep.subr.mxu0 0.0
    %110 = vmatpush1.msra.mxu0 0.0
    %111 = vmatprep.subr.mxu0 0.0
    %112 = vmatpush1.msra.mxu0 0.0
    %113 = vmatprep.subr.mxu0 0.0
    %114 = vmatpush1.msra.mxu0 0.0
    %115 = vmatprep.subr.mxu0 0.0
    %116 = vmatpush1.msra.mxu0 0.0
    %117 = vmatprep.subr.mxu0 0.0
    %118 = vmatpush1.msra.mxu0 0.0
    %119 = vmatprep.subr.mxu0 0.0
    %120 = vmatpush1.msra.mxu0 0.0
    %121 = vmatprep.mubr.f32.mxu0 0.0
    %122 = vmatmul.mubr.f32.gmra.mrb[0].mxu0 %v55
    %v123 = vpop.f32.mrb[0].mxu0
    %v124 = vadd.f32 %v51, %v123
    %v125 = vpop.f32.mrb[0].mxu0
    %126 = vdwg.mxu0
    %v127 = vld [vmem:[%s3] sm:$0xff]
    %v128 = vld [vmem:[%s3 + $0x8] sm:$0xff]
    %v129 = vld [vmem:[%s3 + $0x10] sm:$0xff]
    %v130 = vld [vmem:[%s3 + $0x18] sm:$0xff]
    %v131 = vld [vmem:[%s3 + $0x20] sm:$0xff]
    %v132 = vld [vmem:[%s3 + $0x28] sm:$0xff]
    %v133 = vld [vmem:[%s3 + $0x30] sm:$0xff]
    %v134 = vld [vmem:[%s3 + $0x38] sm:$0xff]
    %v135 = vld [vmem:[%s3 + $0x40] sm:$0xff]
    %v136 = vld [vmem:[%s3 + $0x48] sm:$0xff]
    %v137 = vld [vmem:[%s3 + $0x50] sm:$0xff]
    %v138 = vld [vmem:[%s3 + $0x58] sm:$0xff]
    %v139 = vld [vmem:[%s3 + $0x60] sm:$0xff]
    %v140 = vld [vmem:[%s3 + $0x68] sm:$0xff]
    %v141 = vld [vmem:[%s3 + $0x70] sm:$0xff]
    %v142 = vld [vmem:[%s3 + $0x78] sm:$0xff]
    %v143 = vld [vmem:[%s4] sm:$0x1]
    %v145 = vlaneseq
    %v146 = vshrl.u32 %v145, 7
    %v147 = vsub.s32 0, %v146
    %v148 = vrot.slane %v143, %v147
    %150 = vmatprep.subr.mxu0 0.0
    %151 = vmatpush1.msra.mxu0 %v127
    %152 = vmatprep.subr.mxu0 0.0
    %153 = vmatpush1.msra.mxu0 %v128
    %154 = vmatprep.subr.mxu0 0.0
    %155 = vmatpush1.msra.mxu0 %v129
    %156 = vmatprep.subr.mxu0 0.0
    %157 = vmatpush1.msra.mxu0 %v130
    %158 = vmatprep.subr.mxu0 0.0
    %159 = vmatpush1.msra.mxu0 %v131
    %160 = vmatprep.subr.mxu0 0.0
    %161 = vmatpush1.msra.mxu0 %v132
    %162 = vmatprep.subr.mxu0 0.0
    %163 = vmatpush1.msra.mxu0 %v133
    %164 = vmatprep.subr.mxu0 0.0
    %165 = vmatpush1.msra.mxu0 %v134
    %166 = vmatprep.subr.mxu0 0.0
    %167 = vmatpush1.msra.mxu0 %v135
    %168 = vmatprep.subr.mxu0 0.0
    %169 = vmatpush1.msra.mxu0 %v136
    %170 = vmatprep.subr.mxu0 0.0
    %171 = vmatpush1.msra.mxu0 %v137
    %172 = vmatprep.subr.mxu0 0.0
    %173 = vmatpush1.msra.mxu0 %v138
    %174 = vmatprep.subr.mxu0 0.0
    %175 = vmatpush1.msra.mxu0 %v139
    %176 = vmatprep.subr.mxu0 0.0
    %177 = vmatpush1.msra.mxu0 %v140
    %178 = vmatprep.subr.mxu0 0.0
    %179 = vmatpush1.msra.mxu0 %v141
    %180 = vmatprep.subr.mxu0 0.0
    %181 = vmatpush1.msra.mxu0 %v142
    %182 = vmatprep.subr.mxu0 0.0
    %183 = vmatpush1.msra.mxu0 0.0
    %184 = vmatprep.subr.mxu0 0.0
    %185 = vmatpush1.msra.mxu0 0.0
    %186 = vmatprep.subr.mxu0 0.0
    %187 = vmatpush1.msra.mxu0 0.0
    %188 = vmatprep.subr.mxu0 0.0
    %189 = vmatpush1.msra.mxu0 0.0
    %190 = vmatprep.subr.mxu0 0.0
    %191 = vmatpush1.msra.mxu0 0.0
    %192 = vmatprep.subr.mxu0 0.0
    %193 = vmatpush1.msra.mxu0 0.0
    %194 = vmatprep.subr.mxu0 0.0
    %195 = vmatpush1.msra.mxu0 0.0
    %196 = vmatprep.subr.mxu0 0.0
    %197 = vmatpush1.msra.mxu0 0.0
    %198 = vmatprep.subr.mxu0 0.0
    %199 = vmatpush1.msra.mxu0 0.0
    %200 = vmatprep.subr.mxu0 0.0
    %201 = vmatpush1.msra.mxu0 0.0
    %202 = vmatprep.subr.mxu0 0.0
    %203 = vmatpush1.msra.mxu0 0.0
    %204 = vmatprep.subr.mxu0 0.0
    %205 = vmatpush1.msra.mxu0 0.0
    %206 = vmatprep.subr.mxu0 0.0
    %207 = vmatpush1.msra.mxu0 0.0
    %208 = vmatprep.subr.mxu0 0.0
    %209 = vmatpush1.msra.mxu0 0.0
    %210 = vmatprep.subr.mxu0 0.0
    %211 = vmatpush1.msra.mxu0 0.0
    %212 = vmatprep.subr.mxu0 0.0
    %213 = vmatpush1.msra.mxu0 0.0
    %214 = vmatprep.mubr.f32.mxu0 0.0
    %215 = vmatmul.mubr.f32.gmra.mrb[0].mxu0 %v124
    %v216 = vpop.f32.mrb[0].mxu0
    %v217 = vadd.f32 %v148, %v216
    %v218 = vpop.f32.mrb[0].mxu0
    %219 = vdwg.mxu0
    %v220 = vld [vmem:[%s5] sm:$0xff]
    %v221 = vld [vmem:[%s5 + $0x8] sm:$0xff]
    %v222 = vld [vmem:[%s5 + $0x10] sm:$0xff]
    %v223 = vld [vmem:[%s5 + $0x18] sm:$0xff]
    %v224 = vld [vmem:[%s5 + $0x20] sm:$0xff]
    %v225 = vld [vmem:[%s5 + $0x28] sm:$0xff]
    %v226 = vld [vmem:[%s5 + $0x30] sm:$0xff]
    %v227 = vld [vmem:[%s5 + $0x38] sm:$0xff]
    %v228 = vld [vmem:[%s5 + $0x40] sm:$0xff]
    %v229 = vld [vmem:[%s5 + $0x48] sm:$0xff]
    %v230 = vld [vmem:[%s5 + $0x50] sm:$0xff]
    %v231 = vld [vmem:[%s5 + $0x58] sm:$0xff]
    %v232 = vld [vmem:[%s5 + $0x60] sm:$0xff]
    %v233 = vld [vmem:[%s5 + $0x68] sm:$0xff]
    %v234 = vld [vmem:[%s5 + $0x70] sm:$0xff]
    %v235 = vld [vmem:[%s5 + $0x78] sm:$0xff]
    %v236 = vld [vmem:[%s6] sm:$0x1]
    %v238 = vlaneseq
    %v239 = vshrl.u32 %v238, 7
    %v240 = vsub.s32 0, %v239
    %v241 = vrot.slane %v236, %v240
    %243 = vmatprep.subr.mxu0 0.0
    %244 = vmatpush1.msra.mxu0 %v220
    %245 = vmatprep.subr.mxu0 0.0
    %246 = vmatpush1.msra.mxu0 %v221
    %247 = vmatprep.subr.mxu0 0.0
    %248 = vmatpush1.msra.mxu0 %v222
    %249 = vmatprep.subr.mxu0 0.0
    %250 = vmatpush1.msra.mxu0 %v223
    %251 = vmatprep.subr.mxu0 0.0
    %252 = vmatpush1.msra.mxu0 %v224
    %253 = vmatprep.subr.mxu0 0.0
    %254 = vmatpush1.msra.mxu0 %v225
    %255 = vmatprep.subr.mxu0 0.0
    %256 = vmatpush1.msra.mxu0 %v226
    %257 = vmatprep.subr.mxu0 0.0
    %258 = vmatpush1.msra.mxu0 %v227
    %259 = vmatprep.subr.mxu0 0.0
    %260 = vmatpush1.msra.mxu0 %v228
    %261 = vmatprep.subr.mxu0 0.0
    %262 = vmatpush1.msra.mxu0 %v229
    %263 = vmatprep.subr.mxu0 0.0
    %264 = vmatpush1.msra.mxu0 %v230
    %265 = vmatprep.subr.mxu0 0.0
    %266 = vmatpush1.msra.mxu0 %v231
    %267 = vmatprep.subr.mxu0 0.0
    %268 = vmatpush1.msra.mxu0 %v232
    %269 = vmatprep.subr.mxu0 0.0
    %270 = vmatpush1.msra.mxu0 %v233
    %271 = vmatprep.subr.mxu0 0.0
    %272 = vmatpush1.msra.mxu0 %v234
    %273 = vmatprep.subr.mxu0 0.0
    %274 = vmatpush1.msra.mxu0 %v235
    %275 = vmatprep.subr.mxu0 0.0
    %276 = vmatpush1.msra.mxu0 0.0
    %277 = vmatprep.subr.mxu0 0.0
    %278 = vmatpush1.msra.mxu0 0.0
    %279 = vmatprep.subr.mxu0 0.0
    %280 = vmatpush1.msra.mxu0 0.0
    %281 = vmatprep.subr.mxu0 0.0
    %282 = vmatpush1.msra.mxu0 0.0
    %283 = vmatprep.subr.mxu0 0.0
    %284 = vmatpush1.msra.mxu0 0.0
    %285 = vmatprep.subr.mxu0 0.0
    %286 = vmatpush1.msra.mxu0 0.0
    %287 = vmatprep.subr.mxu0 0.0
    %288 = vmatpush1.msra.mxu0 0.0
    %289 = vmatprep.subr.mxu0 0.0
    %290 = vmatpush1.msra.mxu0 0.0
    %291 = vmatprep.subr.mxu0 0.0
    %292 = vmatpush1.msra.mxu0 0.0
    %293 = vmatprep.subr.mxu0 0.0
    %294 = vmatpush1.msra.mxu0 0.0
    %295 = vmatprep.subr.mxu0 0.0
    %296 = vmatpush1.msra.mxu0 0.0
    %297 = vmatprep.subr.mxu0 0.0
    %298 = vmatpush1.msra.mxu0 0.0
    %299 = vmatprep.subr.mxu0 0.0
    %300 = vmatpush1.msra.mxu0 0.0
    %301 = vmatprep.subr.mxu0 0.0
    %302 = vmatpush1.msra.mxu0 0.0
    %303 = vmatprep.subr.mxu0 0.0
    %304 = vmatpush1.msra.mxu0 0.0
    %305 = vmatprep.subr.mxu0 0.0
    %306 = vmatpush1.msra.mxu0 0.0
    %307 = vmatprep.mubr.f32.mxu0 0.0
    %308 = vmatmul.mubr.f32.gmra.mrb[0].mxu0 %v217
    %v309 = vpop.f32.mrb[0].mxu0
    %v310 = vadd.f32 %v241, %v309
    %v311 = vpop.f32.mrb[0].mxu0
    %312 = vdwg.mxu0
    %vm313 = vcmask 130048
    %314 = vst.msk [vmem:[#allocation5] sm:$0xff] %vm313, %v310
    // Predicated region
    $region34: #{tpu_custom_call.1} parent=1 // pred_check
      _
    $region35: #{tpu_custom_call.1} parent=1 // pred_check_branch
      %316 = sbr.rel (0) target = $region37
    $region36: #{tpu_custom_call.1} parent=1 // pred_region
      %s318 = ssub.s32 128, 128
      %319 = vsyncadd [#allocation4], %s318
      %s321 = sshll.u32 [#allocation5], 4
      %s322 = int_to_ptr.vmem [resolvable:$true] %s321
      %324 = dma.vmem_to_hbm [thread:$0]  %s322, 128, %s7, [#allocation4]
    $region37: #{tpu_custom_call.1} parent=1 // pred_fallthru
      _
    // Predicated region
    $region38: #{tpu_custom_call.1} parent=1 // pred_check
      _
    $region39: #{tpu_custom_call.1} parent=1 // pred_check_branch
      %326 = sbr.rel (0) target = $region41
    $region40: #{tpu_custom_call.1} parent=1 // pred_region
      %327 = dma.done [#allocation4], 128
    $region41: #{tpu_custom_call.1} parent=1 // pred_fallthru
      _
    %328 = vsyncpa [#allocation3], 1
    %329 = vsyncpa [#allocation4], 1

</llo_original>
